<compile_context>
chip_gen: v5e
topology: v5e:2x2
jax: 0.10.0
libtpu: 0.0.40
codegen_flags: <defaults>
</compile_context>

<pallas_src>
import functools

import jax
import jax.numpy as jnp
import numpy as np
from jax.experimental import pallas as pl
from jax.experimental.pallas import tpu as pltpu

KSIZE = 7
PAD = (KSIZE - 1) // 2  # 3
BN_EPS = 1e-5


def _pick_c_tile(C, HW, esize, budget_bytes=4 * 1024 * 1024):
    """Largest channel tile that divides C, is sublane-friendly (C itself or a
    multiple of 8), and keeps a single x tile under `budget_bytes`."""
    divs = [d for d in range(1, C + 1) if C % d == 0 and (d == C or d % 8 == 0)]
    fitting = [d for d in divs if d * HW * esize <= budget_bytes]
    return max(fitting) if fitting else min(divs)


def spatial_gate_kernel(w_ref, s_ref, x_ref, o_ref, mx_ref, sm_ref, *, H, W, C):
    """Grid = (batch, channel-tile).  Flattened (lane-dense) spatial layout.

    w_ref : VMEM f32[8,16]  w_ref[dj+3, c*7 + di+3] = conv_w[0, c, di+3, dj+3]
                            (row 7 and columns 14,15 are zero padding)
    s_ref : SMEM f32[3]     [conv_b, bn_scale, bn_shift]   (eval-mode BN folded)
    x_ref : VMEM [1, C_TILE, H*W]   input channel tile (no spatial padding)
    o_ref : VMEM [1, 1, H*W]        sigmoid attention map (written on last step)
    mx_ref, sm_ref : VMEM f32[1, H*W]  running channel max / sum accumulators
    """
    c_step = pl.program_id(1)
    n_c = pl.num_programs(1)
    HW = H * W

    # ---- ChannelPool: running max / sum over the channel grid axis ---------
    xv = x_ref[0]                                                  # (C_TILE, HW)
    blk_max = jnp.max(xv, axis=0, keepdims=True).astype(jnp.float32)
    blk_sum = jnp.sum(xv.astype(jnp.float32), axis=0, keepdims=True)

    @pl.when(c_step == 0)
    def _init():
        mx_ref[...] = jnp.full_like(mx_ref, -jnp.inf)
        sm_ref[...] = jnp.zeros_like(sm_ref)

    mx_ref[...] = jnp.maximum(mx_ref[...], blk_max)
    sm_ref[...] = sm_ref[...] + blk_sum

    # ---- 7x7 conv (zero pad) + folded BN + sigmoid on the last channel step
    @pl.when(c_step == n_c - 1)
    def _finalize():
        # Stacked pooled map: row 0 = channel max, row 1 = channel mean.
        pooled = jnp.concatenate(
            [mx_ref[...], sm_ref[...] * (1.0 / C)], axis=0)        # (2, HW)

        wt = w_ref[...]                                            # (8, 16)
        pos = jax.lax.broadcasted_iota(jnp.int32, (1, HW), 1)
        col = jax.lax.rem(pos, jnp.int32(W))                       # pos >= 0

        # acc[dj+3, p] = sum_{c,di} w[c,di,dj] * pooled_c[p + di*W]  (row-masked)
        acc = jnp.zeros((KSIZE + 1, HW), jnp.float32)
        for di in range(-PAD, PAD + 1):
            s_row = di * W
            ym = pooled if s_row == 0 else pltpu.roll(
                pooled, shift=(-s_row) % HW, axis=1)               # XLU roll
            if s_row != 0:
                row_ok = (pos >= -s_row) & (pos < HW - s_row)      # row validity
                ym = jnp.where(row_ok, ym, 0.0)
            w_max = wt[:, di + PAD:di + PAD + 1]                   # (8, 1), c=0
            w_mean = wt[:, KSIZE + di + PAD:KSIZE + di + PAD + 1]  # (8, 1), c=1
            acc = acc + w_max * ym[0:1, :] + w_mean * ym[1:2, :]   # (8,HW) FMAs

        # Column shifts: roll each dj-row along lanes, mask invalid columns.
        out = jnp.zeros((1, HW), jnp.float32)
        for dj in range(-PAD, PAD + 1):
            row = acc[dj + PAD:dj + PAD + 1, :]                    # (1, HW)
            term = row if dj == 0 else pltpu.roll(row, shift=(-dj) % HW, axis=1)
            if dj != 0:
                col_ok = ((col + dj) >= 0) & ((col + dj) < W)      # column mask
                term = jnp.where(col_ok, term, 0.0)
            out = out + term

        conv = out + s_ref[0]                                      # conv bias
        bn = s_ref[1] * conv + s_ref[2]                            # folded BN
        o_ref[...] = jax.nn.sigmoid(bn).reshape(o_ref.shape).astype(o_ref.dtype)


def spatial_gate(x, conv_w, conv_b, gamma, beta, run_mean, run_var):
    """x: [B, C, H, W] (NCHW).  Returns [B, 1, H, W] attention map."""
    B, C, H, W = x.shape
    HW = H * W

    # Lane-dense view of x (free reshape: NCHW is contiguous over H*W).
    xf = x.reshape(B, C, HW)

    # Weight tile for VMEM: rows = dj+3 (7 used), cols = c*7 + di+3 (14 used).
    w2 = conv_w.reshape(2, KSIZE, KSIZE).astype(jnp.float32)       # [c, di, dj]
    wt = jnp.zeros((8, 16), jnp.float32).at[:KSIZE, :2 * KSIZE].set(
        jnp.transpose(w2, (2, 0, 1)).reshape(KSIZE, 2 * KSIZE))

    # Fold eval-mode BN into scale/shift; 3 scalars live in SMEM.
    scale = gamma / jnp.sqrt(run_var + BN_EPS)
    shift = beta - scale * run_mean
    scal = jnp.concatenate([conv_b.reshape(-1), scale.reshape(-1),
                            shift.reshape(-1)]).astype(jnp.float32)  # (3,)

    esize = x.dtype.itemsize
    c_tile = _pick_c_tile(C, HW, esize)
    n_ct = C // c_tile

    cost = pl.CostEstimate(
        flops=int(B * HW * (2 * C + 8 * KSIZE * KSIZE + 6)),
        transcendentals=int(B * HW),
        bytes_accessed=int(B * C * HW * esize + B * HW * esize
                           + wt.size * 4 + scal.size * 4))

    kernel = functools.partial(spatial_gate_kernel, H=H, W=W, C=C)
    out_flat = pl.pallas_call(
        kernel,
        out_shape=jax.ShapeDtypeStruct((B, 1, HW), x.dtype),
        grid=(B, n_ct),
        in_specs=[
            pl.BlockSpec((8, 16), lambda b, c: (0, 0)),             # weights
            pl.BlockSpec(memory_space=pltpu.MemorySpace.SMEM),      # scalars
            pl.BlockSpec((1, c_tile, HW), lambda b, c: (b, c, 0)),  # x tile
        ],
        out_specs=pl.BlockSpec((1, 1, HW), lambda b, c: (b, 0, 0)),
        scratch_shapes=[pltpu.VMEM((1, HW), jnp.float32),           # running max
                        pltpu.VMEM((1, HW), jnp.float32)],          # running sum
        compiler_params=pltpu.CompilerParams(
            dimension_semantics=("parallel", "arbitrary")),
        cost_estimate=cost,
    )(wt, scal, xf)
    return out_flat.reshape(B, 1, H, W)


def spatial_gate_ref(x, conv_w, conv_b, gamma, beta, run_mean, run_var):
    """Pure-JAX reference matching the PyTorch module (BN in eval mode)."""
    ch_max = jnp.max(x, axis=1, keepdims=True)
    ch_mean = jnp.mean(x, axis=1, keepdims=True)
    pooled = jnp.concatenate([ch_max, ch_mean], axis=1)             # (B,2,H,W)
    conv = jax.lax.conv_general_dilated(
        pooled, conv_w, window_strides=(1, 1),
        padding=((PAD, PAD), (PAD, PAD)),
        dimension_numbers=("NCHW", "OIHW", "NCHW"),
        precision=jax.lax.Precision.HIGHEST) + conv_b.reshape(1, -1, 1, 1)
    bn = gamma * (conv - run_mean) / jnp.sqrt(run_var + BN_EPS) + beta
    return jax.nn.sigmoid(bn)


if __name__ == "__main__":
    key = jax.random.PRNGKey(0)
    k_x, k_w, k_b, k_g, k_be, k_m, k_v = jax.random.split(key, 7)

    B, C, H, W = 2, 4, 16, 16
    x = jax.random.normal(k_x, (B, C, H, W), dtype=jnp.float32)

    # Deterministic parameters (shapes from the module's __init__).
    fan_in = 2 * KSIZE * KSIZE
    bound = 1.0 / np.sqrt(fan_in)
    conv_w = jax.random.uniform(k_w, (1, 2, KSIZE, KSIZE),
                                minval=-bound, maxval=bound, dtype=jnp.float32)
    conv_b = jax.random.uniform(k_b, (1,), minval=-bound, maxval=bound,
                                dtype=jnp.float32)
    gamma = 1.0 + 0.1 * jax.random.normal(k_g, (1,), dtype=jnp.float32)
    beta = 0.1 * jax.random.normal(k_be, (1,), dtype=jnp.float32)
    run_mean = 0.1 * jax.random.normal(k_m, (1,), dtype=jnp.float32)
    run_var = jax.random.uniform(k_v, (1,), minval=0.5, maxval=1.5,
                                 dtype=jnp.float32)

    out = spatial_gate(x, conv_w, conv_b, gamma, beta, run_mean, run_var)
    out = jax.block_until_ready(out)

    ref = spatial_gate_ref(x, conv_w, conv_b, gamma, beta, run_mean, run_var)
    ref = jax.block_until_ready(ref)

    assert out.shape == (B, 1, H, W), out.shape
    np.testing.assert_allclose(np.asarray(out), np.asarray(ref),
                               rtol=1e-5, atol=1e-5)
    print("KERNEL_OK")
</pallas_src>

<mosaic_0001>
module attributes {stable_mosaic.version = 11 : i64} {
  func.func @spatial_gate_kernel(%arg0: i32, %arg1: i32, %arg2: memref<8x16xf32, #tpu.memory_space<vmem>>, %arg3: memref<3xf32, #tpu.memory_space<smem>>, %arg4: memref<1x4x256xf32, #tpu.memory_space<vmem>>, %arg5: memref<1x1x256xf32, #tpu.memory_space<vmem>>, %arg6: memref<1x256xf32, #tpu.memory_space<vmem>>, %arg7: memref<1x256xf32, #tpu.memory_space<vmem>>) attributes {dimension_semantics = [#tpu.dimension_semantics<parallel>, #tpu.dimension_semantics<arbitrary>], iteration_bounds = array<i64: 2, 1>, scalar_prefetch = 0 : i64, scratch_operands = 2 : i64, tpu.core_type = #tpu.core_type<tc>, window_params = [{pipeline_mode = #tpu.pipeline_mode<synchronous>, transform_indices = @transform_0, window_bounds = array<i64: 8, 16>}, {transform_indices = @transform_1, window_bounds = array<i64: 3>}, {transform_indices = @transform_2, window_bounds = array<i64: 1, 4, 256>}, {transform_indices = @transform_3, window_bounds = array<i64: 1, 1, 256>}]} {
    %c0 = arith.constant 0 : index
    %c0_0 = arith.constant 0 : index
    %c0_1 = arith.constant 0 : index
    %0 = vector.load %arg4[%c0, %c0_0, %c0_1] : memref<1x4x256xf32, #tpu.memory_space<vmem>>, vector<1x4x256xf32>
    %1 = vector.shape_cast %0 : vector<1x4x256xf32> to vector<4x256xf32>
    %cst = arith.constant dense<0xFF800000> : vector<256xf32>
    %2 = vector.multi_reduction <maximumf>, %1, %cst [0] : vector<4x256xf32> to vector<256xf32>
    %3 = vector.shape_cast %2 : vector<256xf32> to vector<1x256xf32>
    %cst_2 = arith.constant dense<0.000000e+00> : vector<256xf32>
    %4 = vector.multi_reduction <add>, %1, %cst_2 [0] : vector<4x256xf32> to vector<256xf32>
    %5 = vector.shape_cast %4 : vector<256xf32> to vector<1x256xf32>
    %c0_i32 = arith.constant 0 : i32
    %6 = arith.cmpi eq, %arg1, %c0_i32 : i32
    %7 = arith.extui %6 : i1 to i32
    %c0_i32_3 = arith.constant 0 : i32
    %8 = arith.cmpi ne, %7, %c0_i32_3 : i32
    scf.if %8 {
      %cst_14 = arith.constant 0xFF800000 : f32
      %18 = vector.broadcast %cst_14 : f32 to vector<1x256xf32>
      %c0_15 = arith.constant 0 : index
      %c0_16 = arith.constant 0 : index
      %19 = vector.load %arg6[%c0_15, %c0_16] : memref<1x256xf32, #tpu.memory_space<vmem>>, vector<1x256xf32>
      tpu.vector_store %arg6[%c0_15, %c0_16], %18 {strides = array<i32>} : memref<1x256xf32, #tpu.memory_space<vmem>>, vector<1x256xf32>,
      %cst_17 = arith.constant 0.000000e+00 : f32
      %20 = vector.broadcast %cst_17 : f32 to vector<1x256xf32>
      %c0_18 = arith.constant 0 : index
      %c0_19 = arith.constant 0 : index
      %21 = vector.load %arg7[%c0_18, %c0_19] : memref<1x256xf32, #tpu.memory_space<vmem>>, vector<1x256xf32>
      tpu.vector_store %arg7[%c0_18, %c0_19], %20 {strides = array<i32>} : memref<1x256xf32, #tpu.memory_space<vmem>>, vector<1x256xf32>,
    } else {
    }
    %c0_4 = arith.constant 0 : index
    %c0_5 = arith.constant 0 : index
    %9 = vector.load %arg6[%c0_4, %c0_5] : memref<1x256xf32, #tpu.memory_space<vmem>>, vector<1x256xf32>
    %10 = arith.maximumf %9, %3 : vector<1x256xf32>
    %c0_6 = arith.constant 0 : index
    %c0_7 = arith.constant 0 : index
    %11 = vector.load %arg6[%c0_6, %c0_7] : memref<1x256xf32, #tpu.memory_space<vmem>>, vector<1x256xf32>
    tpu.vector_store %arg6[%c0_6, %c0_7], %10 {strides = array<i32>} : memref<1x256xf32, #tpu.memory_space<vmem>>, vector<1x256xf32>,
    %c0_8 = arith.constant 0 : index
    %c0_9 = arith.constant 0 : index
    %12 = vector.load %arg7[%c0_8, %c0_9] : memref<1x256xf32, #tpu.memory_space<vmem>>, vector<1x256xf32>
    %13 = arith.addf %12, %5 : vector<1x256xf32>
    %c0_10 = arith.constant 0 : index
    %c0_11 = arith.constant 0 : index
    %14 = vector.load %arg7[%c0_10, %c0_11] : memref<1x256xf32, #tpu.memory_space<vmem>>, vector<1x256xf32>
    tpu.vector_store %arg7[%c0_10, %c0_11], %13 {strides = array<i32>} : memref<1x256xf32, #tpu.memory_space<vmem>>, vector<1x256xf32>,
    %c0_i32_12 = arith.constant 0 : i32
    %15 = arith.cmpi eq, %arg1, %c0_i32_12 : i32
    %16 = arith.extui %15 : i1 to i32
    %c0_i32_13 = arith.constant 0 : i32
    %17 = arith.cmpi ne, %16, %c0_i32_13 : i32
    scf.if %17 {
      %c0_14 = arith.constant 0 : index
      %c0_15 = arith.constant 0 : index
      %18 = vector.load %arg6[%c0_14, %c0_15] : memref<1x256xf32, #tpu.memory_space<vmem>>, vector<1x256xf32>
      %c0_16 = arith.constant 0 : index
      %c0_17 = arith.constant 0 : index
      %19 = vector.load %arg7[%c0_16, %c0_17] : memref<1x256xf32, #tpu.memory_space<vmem>>, vector<1x256xf32>
      %cst_18 = arith.constant 2.500000e-01 : f32
      %20 = vector.broadcast %cst_18 : f32 to vector<1x256xf32>
      %21 = arith.mulf %19, %20 : vector<1x256xf32>
      %22 = tpu.concatenate %18, %21 in 0 : vector<1x256xf32>, vector<1x256xf32> -> vector<2x256xf32>
      %c0_19 = arith.constant 0 : index
      %c0_20 = arith.constant 0 : index
      %23 = vector.load %arg2[%c0_19, %c0_20] : memref<8x16xf32, #tpu.memory_space<vmem>>, vector<8x16xf32>
      %24 = tpu.iota {dimensions = array<i32: 1>} : vector<1x256xi32>
      %c16_i32 = arith.constant 16 : i32
      %25 = vector.broadcast %c16_i32 : i32 to vector<1x256xi32>
      %26 = arith.remsi %24, %25 : vector<1x256xi32>
      %cst_21 = arith.constant 0.000000e+00 : f32
      %27 = vector.broadcast %cst_21 : f32 to vector<8x256xf32>
      %c48_i32 = arith.constant 48 : i32
      %28 = tpu.dynamic_rotate %22 by %c48_i32 dim 1 : vector<2x256xf32>, i32 -> vector<2x256xf32>
      %c48_i32_22 = arith.constant 48 : i32
      %29 = vector.broadcast %c48_i32_22 : i32 to vector<1x256xi32>
      %30 = arith.cmpi sge, %24, %29 : vector<1x256xi32>
      %c304_i32 = arith.constant 304 : i32
      %31 = vector.broadcast %c304_i32 : i32 to vector<1x256xi32>
      %32 = arith.cmpi slt, %24, %31 : vector<1x256xi32>
      %33 = arith.andi %30, %32 : vector<1x256xi1>
      %cst_23 = arith.constant 0.000000e+00 : f32
      %34 = vector.shape_cast %33 : vector<1x256xi1> to vector<1x256xi1>
      %35 = vector.broadcast %34 : vector<1x256xi1> to vector<2x256xi1>
      %36 = vector.broadcast %cst_23 : f32 to vector<2x256xf32>
      %37 = arith.select %35, %28, %36 : vector<2x256xi1>, vector<2x256xf32>
      %38 = vector.extract_strided_slice %23 {offsets = [0, 0], sizes = [8, 1], strides = [1, 1]} : vector<8x16xf32> to vector<8x1xf32>
      %39 = vector.extract_strided_slice %23 {offsets = [0, 7], sizes = [8, 1], strides = [1, 1]} : vector<8x16xf32> to vector<8x1xf32>
      %40 = vector.extract_strided_slice %37 {offsets = [0, 0], sizes = [1, 256], strides = [1, 1]} : vector<2x256xf32> to vector<1x256xf32>
      %41 = vector.broadcast %38 : vector<8x1xf32> to vector<8x256xf32>
      %42 = vector.broadcast %40 : vector<1x256xf32> to vector<8x256xf32>
      %43 = arith.mulf %41, %42 : vector<8x256xf32>
      %44 = arith.addf %27, %43 : vector<8x256xf32>
      %45 = vector.extract_strided_slice %37 {offsets = [1, 0], sizes = [1, 256], strides = [1, 1]} : vector<2x256xf32> to vector<1x256xf32>
      %46 = vector.broadcast %39 : vector<8x1xf32> to vector<8x256xf32>
      %47 = vector.broadcast %45 : vector<1x256xf32> to vector<8x256xf32>
      %48 = arith.mulf %46, %47 : vector<8x256xf32>
      %49 = arith.addf %44, %48 : vector<8x256xf32>
      %c32_i32 = arith.constant 32 : i32
      %50 = tpu.dynamic_rotate %22 by %c32_i32 dim 1 : vector<2x256xf32>, i32 -> vector<2x256xf32>
      %c32_i32_24 = arith.constant 32 : i32
      %51 = vector.broadcast %c32_i32_24 : i32 to vector<1x256xi32>
      %52 = arith.cmpi sge, %24, %51 : vector<1x256xi32>
      %c288_i32 = arith.constant 288 : i32
      %53 = vector.broadcast %c288_i32 : i32 to vector<1x256xi32>
      %54 = arith.cmpi slt, %24, %53 : vector<1x256xi32>
      %55 = arith.andi %52, %54 : vector<1x256xi1>
      %cst_25 = arith.constant 0.000000e+00 : f32
      %56 = vector.shape_cast %55 : vector<1x256xi1> to vector<1x256xi1>
      %57 = vector.broadcast %56 : vector<1x256xi1> to vector<2x256xi1>
      %58 = vector.broadcast %cst_25 : f32 to vector<2x256xf32>
      %59 = arith.select %57, %50, %58 : vector<2x256xi1>, vector<2x256xf32>
      %60 = vector.extract_strided_slice %23 {offsets = [0, 1], sizes = [8, 1], strides = [1, 1]} : vector<8x16xf32> to vector<8x1xf32>
      %61 = vector.extract_strided_slice %23 {offsets = [0, 8], sizes = [8, 1], strides = [1, 1]} : vector<8x16xf32> to vector<8x1xf32>
      %62 = vector.extract_strided_slice %59 {offsets = [0, 0], sizes = [1, 256], strides = [1, 1]} : vector<2x256xf32> to vector<1x256xf32>
      %63 = vector.broadcast %60 : vector<8x1xf32> to vector<8x256xf32>
      %64 = vector.broadcast %62 : vector<1x256xf32> to vector<8x256xf32>
      %65 = arith.mulf %63, %64 : vector<8x256xf32>
      %66 = arith.addf %49, %65 : vector<8x256xf32>
      %67 = vector.extract_strided_slice %59 {offsets = [1, 0], sizes = [1, 256], strides = [1, 1]} : vector<2x256xf32> to vector<1x256xf32>
      %68 = vector.broadcast %61 : vector<8x1xf32> to vector<8x256xf32>
      %69 = vector.broadcast %67 : vector<1x256xf32> to vector<8x256xf32>
      %70 = arith.mulf %68, %69 : vector<8x256xf32>
      %71 = arith.addf %66, %70 : vector<8x256xf32>
      %c16_i32_26 = arith.constant 16 : i32
      %72 = tpu.dynamic_rotate %22 by %c16_i32_26 dim 1 : vector<2x256xf32>, i32 -> vector<2x256xf32>
      %c16_i32_27 = arith.constant 16 : i32
      %73 = vector.broadcast %c16_i32_27 : i32 to vector<1x256xi32>
      %74 = arith.cmpi sge, %24, %73 : vector<1x256xi32>
      %c272_i32 = arith.constant 272 : i32
      %75 = vector.broadcast %c272_i32 : i32 to vector<1x256xi32>
      %76 = arith.cmpi slt, %24, %75 : vector<1x256xi32>
      %77 = arith.andi %74, %76 : vector<1x256xi1>
      %cst_28 = arith.constant 0.000000e+00 : f32
      %78 = vector.shape_cast %77 : vector<1x256xi1> to vector<1x256xi1>
      %79 = vector.broadcast %78 : vector<1x256xi1> to vector<2x256xi1>
      %80 = vector.broadcast %cst_28 : f32 to vector<2x256xf32>
      %81 = arith.select %79, %72, %80 : vector<2x256xi1>, vector<2x256xf32>
      %82 = vector.extract_strided_slice %23 {offsets = [0, 2], sizes = [8, 1], strides = [1, 1]} : vector<8x16xf32> to vector<8x1xf32>
      %83 = vector.extract_strided_slice %23 {offsets = [0, 9], sizes = [8, 1], strides = [1, 1]} : vector<8x16xf32> to vector<8x1xf32>
      %84 = vector.extract_strided_slice %81 {offsets = [0, 0], sizes = [1, 256], strides = [1, 1]} : vector<2x256xf32> to vector<1x256xf32>
      %85 = vector.broadcast %82 : vector<8x1xf32> to vector<8x256xf32>
      %86 = vector.broadcast %84 : vector<1x256xf32> to vector<8x256xf32>
      %87 = arith.mulf %85, %86 : vector<8x256xf32>
      %88 = arith.addf %71, %87 : vector<8x256xf32>
      %89 = vector.extract_strided_slice %81 {offsets = [1, 0], sizes = [1, 256], strides = [1, 1]} : vector<2x256xf32> to vector<1x256xf32>
      %90 = vector.broadcast %83 : vector<8x1xf32> to vector<8x256xf32>
      %91 = vector.broadcast %89 : vector<1x256xf32> to vector<8x256xf32>
      %92 = arith.mulf %90, %91 : vector<8x256xf32>
      %93 = arith.addf %88, %92 : vector<8x256xf32>
      %94 = vector.extract_strided_slice %23 {offsets = [0, 3], sizes = [8, 1], strides = [1, 1]} : vector<8x16xf32> to vector<8x1xf32>
      %95 = vector.extract_strided_slice %23 {offsets = [0, 10], sizes = [8, 1], strides = [1, 1]} : vector<8x16xf32> to vector<8x1xf32>
      %96 = vector.extract_strided_slice %22 {offsets = [0, 0], sizes = [1, 256], strides = [1, 1]} : vector<2x256xf32> to vector<1x256xf32>
      %97 = vector.broadcast %94 : vector<8x1xf32> to vector<8x256xf32>
      %98 = vector.broadcast %96 : vector<1x256xf32> to vector<8x256xf32>
      %99 = arith.mulf %97, %98 : vector<8x256xf32>
      %100 = arith.addf %93, %99 : vector<8x256xf32>
      %101 = vector.extract_strided_slice %22 {offsets = [1, 0], sizes = [1, 256], strides = [1, 1]} : vector<2x256xf32> to vector<1x256xf32>
      %102 = vector.broadcast %95 : vector<8x1xf32> to vector<8x256xf32>
      %103 = vector.broadcast %101 : vector<1x256xf32> to vector<8x256xf32>
      %104 = arith.mulf %102, %103 : vector<8x256xf32>
      %105 = arith.addf %100, %104 : vector<8x256xf32>
      %c240_i32 = arith.constant 240 : i32
      %106 = tpu.dynamic_rotate %22 by %c240_i32 dim 1 : vector<2x256xf32>, i32 -> vector<2x256xf32>
      %c-16_i32 = arith.constant -16 : i32
      %107 = vector.broadcast %c-16_i32 : i32 to vector<1x256xi32>
      %108 = arith.cmpi sge, %24, %107 : vector<1x256xi32>
      %c240_i32_29 = arith.constant 240 : i32
      %109 = vector.broadcast %c240_i32_29 : i32 to vector<1x256xi32>
      %110 = arith.cmpi slt, %24, %109 : vector<1x256xi32>
      %111 = arith.andi %108, %110 : vector<1x256xi1>
      %cst_30 = arith.constant 0.000000e+00 : f32
      %112 = vector.shape_cast %111 : vector<1x256xi1> to vector<1x256xi1>
      %113 = vector.broadcast %112 : vector<1x256xi1> to vector<2x256xi1>
      %114 = vector.broadcast %cst_30 : f32 to vector<2x256xf32>
      %115 = arith.select %113, %106, %114 : vector<2x256xi1>, vector<2x256xf32>
      %116 = vector.extract_strided_slice %23 {offsets = [0, 4], sizes = [8, 1], strides = [1, 1]} : vector<8x16xf32> to vector<8x1xf32>
      %117 = vector.extract_strided_slice %23 {offsets = [0, 11], sizes = [8, 1], strides = [1, 1]} : vector<8x16xf32> to vector<8x1xf32>
      %118 = vector.extract_strided_slice %115 {offsets = [0, 0], sizes = [1, 256], strides = [1, 1]} : vector<2x256xf32> to vector<1x256xf32>
      %119 = vector.broadcast %116 : vector<8x1xf32> to vector<8x256xf32>
      %120 = vector.broadcast %118 : vector<1x256xf32> to vector<8x256xf32>
      %121 = arith.mulf %119, %120 : vector<8x256xf32>
      %122 = arith.addf %105, %121 : vector<8x256xf32>
      %123 = vector.extract_strided_slice %115 {offsets = [1, 0], sizes = [1, 256], strides = [1, 1]} : vector<2x256xf32> to vector<1x256xf32>
      %124 = vector.broadcast %117 : vector<8x1xf32> to vector<8x256xf32>
      %125 = vector.broadcast %123 : vector<1x256xf32> to vector<8x256xf32>
      %126 = arith.mulf %124, %125 : vector<8x256xf32>
      %127 = arith.addf %122, %126 : vector<8x256xf32>
      %c224_i32 = arith.constant 224 : i32
      %128 = tpu.dynamic_rotate %22 by %c224_i32 dim 1 : vector<2x256xf32>, i32 -> vector<2x256xf32>
      %c-32_i32 = arith.constant -32 : i32
      %129 = vector.broadcast %c-32_i32 : i32 to vector<1x256xi32>
      %130 = arith.cmpi sge, %24, %129 : vector<1x256xi32>
      %c224_i32_31 = arith.constant 224 : i32
      %131 = vector.broadcast %c224_i32_31 : i32 to vector<1x256xi32>
      %132 = arith.cmpi slt, %24, %131 : vector<1x256xi32>
      %133 = arith.andi %130, %132 : vector<1x256xi1>
      %cst_32 = arith.constant 0.000000e+00 : f32
      %134 = vector.shape_cast %133 : vector<1x256xi1> to vector<1x256xi1>
      %135 = vector.broadcast %134 : vector<1x256xi1> to vector<2x256xi1>
      %136 = vector.broadcast %cst_32 : f32 to vector<2x256xf32>
      %137 = arith.select %135, %128, %136 : vector<2x256xi1>, vector<2x256xf32>
      %138 = vector.extract_strided_slice %23 {offsets = [0, 5], sizes = [8, 1], strides = [1, 1]} : vector<8x16xf32> to vector<8x1xf32>
      %139 = vector.extract_strided_slice %23 {offsets = [0, 12], sizes = [8, 1], strides = [1, 1]} : vector<8x16xf32> to vector<8x1xf32>
      %140 = vector.extract_strided_slice %137 {offsets = [0, 0], sizes = [1, 256], strides = [1, 1]} : vector<2x256xf32> to vector<1x256xf32>
      %141 = vector.broadcast %138 : vector<8x1xf32> to vector<8x256xf32>
      %142 = vector.broadcast %140 : vector<1x256xf32> to vector<8x256xf32>
      %143 = arith.mulf %141, %142 : vector<8x256xf32>
      %144 = arith.addf %127, %143 : vector<8x256xf32>
      %145 = vector.extract_strided_slice %137 {offsets = [1, 0], sizes = [1, 256], strides = [1, 1]} : vector<2x256xf32> to vector<1x256xf32>
      %146 = vector.broadcast %139 : vector<8x1xf32> to vector<8x256xf32>
      %147 = vector.broadcast %145 : vector<1x256xf32> to vector<8x256xf32>
      %148 = arith.mulf %146, %147 : vector<8x256xf32>
      %149 = arith.addf %144, %148 : vector<8x256xf32>
      %c208_i32 = arith.constant 208 : i32
      %150 = tpu.dynamic_rotate %22 by %c208_i32 dim 1 : vector<2x256xf32>, i32 -> vector<2x256xf32>
      %c-48_i32 = arith.constant -48 : i32
      %151 = vector.broadcast %c-48_i32 : i32 to vector<1x256xi32>
      %152 = arith.cmpi sge, %24, %151 : vector<1x256xi32>
      %c208_i32_33 = arith.constant 208 : i32
      %153 = vector.broadcast %c208_i32_33 : i32 to vector<1x256xi32>
      %154 = arith.cmpi slt, %24, %153 : vector<1x256xi32>
      %155 = arith.andi %152, %154 : vector<1x256xi1>
      %cst_34 = arith.constant 0.000000e+00 : f32
      %156 = vector.shape_cast %155 : vector<1x256xi1> to vector<1x256xi1>
      %157 = vector.broadcast %156 : vector<1x256xi1> to vector<2x256xi1>
      %158 = vector.broadcast %cst_34 : f32 to vector<2x256xf32>
      %159 = arith.select %157, %150, %158 : vector<2x256xi1>, vector<2x256xf32>
      %160 = vector.extract_strided_slice %23 {offsets = [0, 6], sizes = [8, 1], strides = [1, 1]} : vector<8x16xf32> to vector<8x1xf32>
      %161 = vector.extract_strided_slice %23 {offsets = [0, 13], sizes = [8, 1], strides = [1, 1]} : vector<8x16xf32> to vector<8x1xf32>
      %162 = vector.extract_strided_slice %159 {offsets = [0, 0], sizes = [1, 256], strides = [1, 1]} : vector<2x256xf32> to vector<1x256xf32>
      %163 = vector.broadcast %160 : vector<8x1xf32> to vector<8x256xf32>
      %164 = vector.broadcast %162 : vector<1x256xf32> to vector<8x256xf32>
      %165 = arith.mulf %163, %164 : vector<8x256xf32>
      %166 = arith.addf %149, %165 : vector<8x256xf32>
      %167 = vector.extract_strided_slice %159 {offsets = [1, 0], sizes = [1, 256], strides = [1, 1]} : vector<2x256xf32> to vector<1x256xf32>
      %168 = vector.broadcast %161 : vector<8x1xf32> to vector<8x256xf32>
      %169 = vector.broadcast %167 : vector<1x256xf32> to vector<8x256xf32>
      %170 = arith.mulf %168, %169 : vector<8x256xf32>
      %171 = arith.addf %166, %170 : vector<8x256xf32>
      %cst_35 = arith.constant 0.000000e+00 : f32
      %172 = vector.broadcast %cst_35 : f32 to vector<1x256xf32>
      %173 = vector.extract_strided_slice %171 {offsets = [0, 0], sizes = [1, 256], strides = [1, 1]} : vector<8x256xf32> to vector<1x256xf32>
      %c3_i32 = arith.constant 3 : i32
      %174 = tpu.dynamic_rotate %173 by %c3_i32 dim 1 : vector<1x256xf32>, i32 -> vector<1x256xf32>
      %c-3_i32 = arith.constant -3 : i32
      %175 = vector.broadcast %c-3_i32 : i32 to vector<1x256xi32>
      %176 = arith.addi %26, %175 : vector<1x256xi32>
      %c0_i32_36 = arith.constant 0 : i32
      %177 = vector.broadcast %c0_i32_36 : i32 to vector<1x256xi32>
      %178 = arith.cmpi sge, %176, %177 : vector<1x256xi32>
      %c-3_i32_37 = arith.constant -3 : i32
      %179 = vector.broadcast %c-3_i32_37 : i32 to vector<1x256xi32>
      %180 = arith.addi %26, %179 : vector<1x256xi32>
      %c16_i32_38 = arith.constant 16 : i32
      %181 = vector.broadcast %c16_i32_38 : i32 to vector<1x256xi32>
      %182 = arith.cmpi slt, %180, %181 : vector<1x256xi32>
      %183 = arith.andi %178, %182 : vector<1x256xi1>
      %cst_39 = arith.constant 0.000000e+00 : f32
      %184 = vector.broadcast %cst_39 : f32 to vector<1x256xf32>
      %185 = arith.select %183, %174, %184 : vector<1x256xi1>, vector<1x256xf32>
      %186 = arith.addf %172, %185 : vector<1x256xf32>
      %187 = vector.extract_strided_slice %171 {offsets = [1, 0], sizes = [1, 256], strides = [1, 1]} : vector<8x256xf32> to vector<1x256xf32>
      %c2_i32 = arith.constant 2 : i32
      %188 = tpu.dynamic_rotate %187 by %c2_i32 dim 1 : vector<1x256xf32>, i32 -> vector<1x256xf32>
      %c-2_i32 = arith.constant -2 : i32
      %189 = vector.broadcast %c-2_i32 : i32 to vector<1x256xi32>
      %190 = arith.addi %26, %189 : vector<1x256xi32>
      %c0_i32_40 = arith.constant 0 : i32
      %191 = vector.broadcast %c0_i32_40 : i32 to vector<1x256xi32>
      %192 = arith.cmpi sge, %190, %191 : vector<1x256xi32>
      %c-2_i32_41 = arith.constant -2 : i32
      %193 = vector.broadcast %c-2_i32_41 : i32 to vector<1x256xi32>
      %194 = arith.addi %26, %193 : vector<1x256xi32>
      %c16_i32_42 = arith.constant 16 : i32
      %195 = vector.broadcast %c16_i32_42 : i32 to vector<1x256xi32>
      %196 = arith.cmpi slt, %194, %195 : vector<1x256xi32>
      %197 = arith.andi %192, %196 : vector<1x256xi1>
      %cst_43 = arith.constant 0.000000e+00 : f32
      %198 = vector.broadcast %cst_43 : f32 to vector<1x256xf32>
      %199 = arith.select %197, %188, %198 : vector<1x256xi1>, vector<1x256xf32>
      %200 = arith.addf %186, %199 : vector<1x256xf32>
      %201 = vector.extract_strided_slice %171 {offsets = [2, 0], sizes = [1, 256], strides = [1, 1]} : vector<8x256xf32> to vector<1x256xf32>
      %c1_i32 = arith.constant 1 : i32
      %202 = tpu.dynamic_rotate %201 by %c1_i32 dim 1 : vector<1x256xf32>, i32 -> vector<1x256xf32>
      %c-1_i32 = arith.constant -1 : i32
      %203 = vector.broadcast %c-1_i32 : i32 to vector<1x256xi32>
      %204 = arith.addi %26, %203 : vector<1x256xi32>
      %c0_i32_44 = arith.constant 0 : i32
      %205 = vector.broadcast %c0_i32_44 : i32 to vector<1x256xi32>
      %206 = arith.cmpi sge, %204, %205 : vector<1x256xi32>
      %c-1_i32_45 = arith.constant -1 : i32
      %207 = vector.broadcast %c-1_i32_45 : i32 to vector<1x256xi32>
      %208 = arith.addi %26, %207 : vector<1x256xi32>
      %c16_i32_46 = arith.constant 16 : i32
      %209 = vector.broadcast %c16_i32_46 : i32 to vector<1x256xi32>
      %210 = arith.cmpi slt, %208, %209 : vector<1x256xi32>
      %211 = arith.andi %206, %210 : vector<1x256xi1>
      %cst_47 = arith.constant 0.000000e+00 : f32
      %212 = vector.broadcast %cst_47 : f32 to vector<1x256xf32>
      %213 = arith.select %211, %202, %212 : vector<1x256xi1>, vector<1x256xf32>
      %214 = arith.addf %200, %213 : vector<1x256xf32>
      %215 = vector.extract_strided_slice %171 {offsets = [3, 0], sizes = [1, 256], strides = [1, 1]} : vector<8x256xf32> to vector<1x256xf32>
      %216 = arith.addf %214, %215 : vector<1x256xf32>
      %217 = vector.extract_strided_slice %171 {offsets = [4, 0], sizes = [1, 256], strides = [1, 1]} : vector<8x256xf32> to vector<1x256xf32>
      %c255_i32 = arith.constant 255 : i32
      %218 = tpu.dynamic_rotate %217 by %c255_i32 dim 1 : vector<1x256xf32>, i32 -> vector<1x256xf32>
      %c1_i32_48 = arith.constant 1 : i32
      %219 = vector.broadcast %c1_i32_48 : i32 to vector<1x256xi32>
      %220 = arith.addi %26, %219 : vector<1x256xi32>
      %c0_i32_49 = arith.constant 0 : i32
      %221 = vector.broadcast %c0_i32_49 : i32 to vector<1x256xi32>
      %222 = arith.cmpi sge, %220, %221 : vector<1x256xi32>
      %c1_i32_50 = arith.constant 1 : i32
      %223 = vector.broadcast %c1_i32_50 : i32 to vector<1x256xi32>
      %224 = arith.addi %26, %223 : vector<1x256xi32>
      %c16_i32_51 = arith.constant 16 : i32
      %225 = vector.broadcast %c16_i32_51 : i32 to vector<1x256xi32>
      %226 = arith.cmpi slt, %224, %225 : vector<1x256xi32>
      %227 = arith.andi %222, %226 : vector<1x256xi1>
      %cst_52 = arith.constant 0.000000e+00 : f32
      %228 = vector.broadcast %cst_52 : f32 to vector<1x256xf32>
      %229 = arith.select %227, %218, %228 : vector<1x256xi1>, vector<1x256xf32>
      %230 = arith.addf %216, %229 : vector<1x256xf32>
      %231 = vector.extract_strided_slice %171 {offsets = [5, 0], sizes = [1, 256], strides = [1, 1]} : vector<8x256xf32> to vector<1x256xf32>
      %c254_i32 = arith.constant 254 : i32
      %232 = tpu.dynamic_rotate %231 by %c254_i32 dim 1 : vector<1x256xf32>, i32 -> vector<1x256xf32>
      %c2_i32_53 = arith.constant 2 : i32
      %233 = vector.broadcast %c2_i32_53 : i32 to vector<1x256xi32>
      %234 = arith.addi %26, %233 : vector<1x256xi32>
      %c0_i32_54 = arith.constant 0 : i32
      %235 = vector.broadcast %c0_i32_54 : i32 to vector<1x256xi32>
      %236 = arith.cmpi sge, %234, %235 : vector<1x256xi32>
      %c2_i32_55 = arith.constant 2 : i32
      %237 = vector.broadcast %c2_i32_55 : i32 to vector<1x256xi32>
      %238 = arith.addi %26, %237 : vector<1x256xi32>
      %c16_i32_56 = arith.constant 16 : i32
      %239 = vector.broadcast %c16_i32_56 : i32 to vector<1x256xi32>
      %240 = arith.cmpi slt, %238, %239 : vector<1x256xi32>
      %241 = arith.andi %236, %240 : vector<1x256xi1>
      %cst_57 = arith.constant 0.000000e+00 : f32
      %242 = vector.broadcast %cst_57 : f32 to vector<1x256xf32>
      %243 = arith.select %241, %232, %242 : vector<1x256xi1>, vector<1x256xf32>
      %244 = arith.addf %230, %243 : vector<1x256xf32>
      %245 = vector.extract_strided_slice %171 {offsets = [6, 0], sizes = [1, 256], strides = [1, 1]} : vector<8x256xf32> to vector<1x256xf32>
      %c253_i32 = arith.constant 253 : i32
      %246 = tpu.dynamic_rotate %245 by %c253_i32 dim 1 : vector<1x256xf32>, i32 -> vector<1x256xf32>
      %c3_i32_58 = arith.constant 3 : i32
      %247 = vector.broadcast %c3_i32_58 : i32 to vector<1x256xi32>
      %248 = arith.addi %26, %247 : vector<1x256xi32>
      %c0_i32_59 = arith.constant 0 : i32
      %249 = vector.broadcast %c0_i32_59 : i32 to vector<1x256xi32>
      %250 = arith.cmpi sge, %248, %249 : vector<1x256xi32>
      %c3_i32_60 = arith.constant 3 : i32
      %251 = vector.broadcast %c3_i32_60 : i32 to vector<1x256xi32>
      %252 = arith.addi %26, %251 : vector<1x256xi32>
      %c16_i32_61 = arith.constant 16 : i32
      %253 = vector.broadcast %c16_i32_61 : i32 to vector<1x256xi32>
      %254 = arith.cmpi slt, %252, %253 : vector<1x256xi32>
      %255 = arith.andi %250, %254 : vector<1x256xi1>
      %cst_62 = arith.constant 0.000000e+00 : f32
      %256 = vector.broadcast %cst_62 : f32 to vector<1x256xf32>
      %257 = arith.select %255, %246, %256 : vector<1x256xi1>, vector<1x256xf32>
      %258 = arith.addf %244, %257 : vector<1x256xf32>
      %c0_63 = arith.constant 0 : index
      %259 = memref.load %arg3[%c0_63] : memref<3xf32, #tpu.memory_space<smem>>
      %260 = vector.broadcast %259 : f32 to vector<1x256xf32>
      %261 = arith.addf %258, %260 : vector<1x256xf32>
      %c1 = arith.constant 1 : index
      %262 = memref.load %arg3[%c1] : memref<3xf32, #tpu.memory_space<smem>>
      %263 = vector.broadcast %262 : f32 to vector<1x256xf32>
      %264 = arith.mulf %263, %261 : vector<1x256xf32>
      %c2 = arith.constant 2 : index
      %265 = memref.load %arg3[%c2] : memref<3xf32, #tpu.memory_space<smem>>
      %266 = vector.broadcast %265 : f32 to vector<1x256xf32>
      %267 = arith.addf %264, %266 : vector<1x256xf32>
      %268 = arith.negf %267 : vector<1x256xf32>
      %269 = math.exp %268 : vector<1x256xf32>
      %cst_64 = arith.constant 1.000000e+00 : f32
      %270 = vector.broadcast %cst_64 : f32 to vector<1x256xf32>
      %271 = arith.addf %270, %269 : vector<1x256xf32>
      %272 = arith.divf %270, %271 : vector<1x256xf32>
      %273 = vector.shape_cast %272 : vector<1x256xf32> to vector<1x1x256xf32>
      %c0_65 = arith.constant 0 : index
      %c0_66 = arith.constant 0 : index
      %c0_67 = arith.constant 0 : index
      %274 = vector.load %arg5[%c0_65, %c0_66, %c0_67] : memref<1x1x256xf32, #tpu.memory_space<vmem>>, vector<1x1x256xf32>
      tpu.vector_store %arg5[%c0_65, %c0_66, %c0_67], %273 {strides = array<i32>} : memref<1x1x256xf32, #tpu.memory_space<vmem>>, vector<1x1x256xf32>,
    } else {
    }
    return
  }
  func.func @transform_0(%arg0: i32, %arg1: i32) -> (i32, i32) {
    %c0_i32 = arith.constant 0 : i32
    %c0_i32_0 = arith.constant 0 : i32
    %c0_i32_1 = arith.constant 0 : i32
    return %c0_i32, %c0_i32_0 : i32, i32
  }
  func.func @transform_1(%arg0: i32, %arg1: i32) -> i32 {
    %c0_i32 = arith.constant 0 : i32
    %c0_i32_0 = arith.constant 0 : i32
    return %c0_i32 : i32
  }
  func.func @transform_2(%arg0: i32, %arg1: i32) -> (i32, i32, i32) {
    %c0_i32 = arith.constant 0 : i32
    %c0_i32_0 = arith.constant 0 : i32
    return %arg0, %arg1, %c0_i32 : i32, i32, i32
  }
  func.func @transform_3(%arg0: i32, %arg1: i32) -> (i32, i32, i32) {
    %c0_i32 = arith.constant 0 : i32
    %c0_i32_0 = arith.constant 0 : i32
    %c0_i32_1 = arith.constant 0 : i32
    return %arg0, %c0_i32, %c0_i32_0 : i32, i32, i32
  }
}

</mosaic_0001>

<llo_original>
// kernel: tpu_custom_call.1
$region0: #{tpu_custom_call.1}
  #allocation0 [shape = 'u32[]', space=smem, size = 0x4, offset = 0x4, fixed_abs, tag = 'smem constant byte address 0x4 - core index']
  #allocation1 [shape = 'u32[72,128]{1,0:T(1,128)}', space=vmem, size = 0x9000, scoped, tag = 'internal scratch']
  #allocation2 [shape = 'f32[1,256]{1,0:T(1,128)}', space=vmem, size = 0x400, scoped, tag = 'scratch operand']
  #allocation3 [shape = 'f32[1,256]{1,0:T(1,128)}', space=vmem, size = 0x400, scoped, tag = 'scratch operand']
  %s0 = inlined_call_operand.hbm [shape: f32[8,16], index: 0, kind: input, shape index: {}]
  %s1 = inlined_call_operand.hbm [shape: f32[3], index: 1, kind: input, shape index: {}]
  %s2 = inlined_call_operand.hbm [shape: f32[2,4,256], index: 2, kind: input, shape index: {}]
  %s3 = inlined_call_operand.hbm [shape: f32[2,1,256], index: 3, kind: output, shape index: {}]
  %s4 = sld [smem:[#allocation0]]
  $region65: #{tpu_custom_call.1} parent=0
    _
  %s6 = ssub.s32 1, %s4
  %s7 = scalar_select 0, %s6, %s4
  $region1: #{tpu_custom_call.1} parent=0
    #allocation4 [shape = 'u8[4096]{0}', space=vmem, size = 0x1000, scoped, tag = 'input window, operand 0, single buffered']
    #allocation5 [shape = 's32[2]{0}', space=sflag, size = 0x8, scoped, tag = 'scoped memory for tpu_custom_call.1']
    #allocation6 [shape = 's32[2]{0}', space=sflag, size = 0x8, scoped, tag = 'scoped memory for tpu_custom_call.1']
    #allocation7 [shape = 's32[2]{0}', space=sflag, size = 0x8, scoped, tag = 'scoped memory for tpu_custom_call.1']
    #allocation8 [shape = 'u8[512]{0}', space=smem, size = 0x200, scoped, tag = 'input window, operand 1, single buffered']
    #allocation9 [shape = 'u8[8192]{0}', space=vmem, size = 0x2000, scoped, tag = 'input window, operand 2']
    #allocation10 [shape = 's32[2]{0}', space=sflag, size = 0x8, scoped, tag = 'scoped memory for tpu_custom_call.1']
    #allocation11 [shape = 'u8[2048]{0}', space=vmem, size = 0x800, scoped, tag = 'output window, operand 0']
    %8 = vsyncpa [#allocation5], 0
    %9 = vsyncpa [#allocation7], 0
    %10 = vsyncpa [#allocation10], 0
    %s11 = scalar_lea.sflag [#allocation10], 1
    %12 = vsyncpa %s11, 0
    %13 = vsyncpa [#allocation6], 0
    %s14 = scalar_lea.sflag [#allocation6], 1
    %15 = vsyncpa %s14, 0
    loop: start=0, step=1, limit=4
    $region2: #{tpu_custom_call.1} parent=1 // loop_pre_header
      _
    $region3: #{tpu_custom_call.1} parent=1 // loop_header
      %s17 = sphi 0, %s21
      %p18 = scmp.ge.s32.totalorder %s17, 4
      %s24 = sphi 0, %s36
      %s25 = sphi 0, %s32
      %s26 = sphi 0, %s24
      %s27 = sphi 0, %s25
      %s28 = sphi 0, %s26
      %s29 = sphi 0, %s27
      %s37 = sphi 0, %s37
      %s39 = sphi 0, %s37
      %s40 = sphi 0, %s39
      %s54 = sphi 0, %s40
      %s58 = sphi 0, %s58
      %s60 = sphi 0, %s58
      %s61 = sphi 0, %s60
      %s75 = sphi 0, %s61
      %s83 = sphi 0, %s85
      %s86 = sphi 0, %s83
      %s87 = sphi 0, %s86
      %s103 = sphi 0, %s87
      %s109 = sphi 0, %s111
      %s112 = sphi 0, %s109
      %s113 = sphi 0, %s112
      %s129 = sphi 0, %s113
    $region4: #{tpu_custom_call.1} parent=1 // loop_header_branch
      %20 = sbr.rel (%p18) target = $region8
    $region5: #{tpu_custom_call.1} parent=1 // loop_body
      %s22 = ssub.s32 %s17, 1
      %s23 = ssub.s32 %s17, 2
      %s30 = sadd.s32 1, %s25
      %p31 = scmp.ge.s32.totalorder %s30, 1
      %s32 = scalar_select %p31, 0, %s30
      %s33 = sadd.s32 1, %s24
      %s34 = scalar_select %p31, %s33, %s24
      %p35 = scmp.ge.s32.totalorder %s34, 2
      %s36 = scalar_select %p35, 0, %s34
      %s38 = sadd.s32 %s37, 1
      %p41 = scmp.eq.s32.totalorder %s17, 1
      %p42 = scmp.ne.s32.totalorder %s37, %s39
      %p43 = scmp.eq.s32.totalorder %s17, 0
      %p44 = por %p42, %p43
      %p45 = scmp.ne.s32.totalorder %s37, %s39
      %p46 = scmp.eq.s32.totalorder %s22, 1
      %p47 = por %p45, %p46
      %p48 = scmp.ne.s32.totalorder %s39, %s40
      %p49 = scmp.eq.s32.totalorder %s22, 0
      %p50 = por %p48, %p49
      %p51 = scmp.ne.s32.totalorder %s39, %s40
      %p52 = scmp.eq.s32.totalorder %s23, 1
      %p53 = por %p51, %p52
      %p55 = scmp.ne.s32.totalorder %s40, %s54
      %p56 = scmp.eq.s32.totalorder %s23, 0
      %p57 = por %p55, %p56
      %s59 = sadd.s32 %s58, 1
      %p62 = scmp.eq.s32.totalorder %s17, 1
      %p63 = scmp.ne.s32.totalorder %s58, %s60
      %p64 = scmp.eq.s32.totalorder %s17, 0
      %p65 = por %p63, %p64
      %p66 = scmp.ne.s32.totalorder %s58, %s60
      %p67 = scmp.eq.s32.totalorder %s22, 1
      %p68 = por %p66, %p67
      %p69 = scmp.ne.s32.totalorder %s60, %s61
      %p70 = scmp.eq.s32.totalorder %s22, 0
      %p71 = por %p69, %p70
      %p72 = scmp.ne.s32.totalorder %s60, %s61
      %p73 = scmp.eq.s32.totalorder %s23, 1
      %p74 = por %p72, %p73
      %p76 = scmp.ne.s32.totalorder %s61, %s75
      %p77 = scmp.eq.s32.totalorder %s23, 0
      %p78 = por %p76, %p77
      %s79 = ssub.s32 %s24, %s36
      %s80 = ssub.s32 %s25, %s32
      %s81 = sor.u32 %s79, %s80
      %p82 = scmp.eq.s32.totalorder %s81, 0
      %s84 = sadd.s32 %s83, 1
      %s85 = scalar_select %p82, %s83, %s84
      %p88 = pneg %p82
      %p89 = scmp.eq.s32.totalorder %s17, 1
      %p90 = por %p88, %p89
      %p91 = scmp.ne.s32.totalorder %s83, %s86
      %p92 = scmp.eq.s32.totalorder %s17, 0
      %p93 = por %p91, %p92
      %p94 = scmp.ne.s32.totalorder %s83, %s86
      %p95 = scmp.eq.s32.totalorder %s22, 1
      %p96 = por %p94, %p95
      %p97 = scmp.ne.s32.totalorder %s86, %s87
      %p98 = scmp.eq.s32.totalorder %s22, 0
      %p99 = por %p97, %p98
      %p100 = scmp.ne.s32.totalorder %s86, %s87
      %p101 = scmp.eq.s32.totalorder %s23, 1
      %p102 = por %p100, %p101
      %p104 = scmp.ne.s32.totalorder %s87, %s103
      %p105 = scmp.eq.s32.totalorder %s23, 0
      %p106 = por %p104, %p105
      %s107 = ssub.s32 %s24, %s36
      %p108 = scmp.eq.s32.totalorder %s107, 0
      %s110 = sadd.s32 %s109, 1
      %s111 = scalar_select %p108, %s109, %s110
      %p114 = pneg %p108
      %p115 = scmp.eq.s32.totalorder %s17, 1
      %p116 = por %p114, %p115
      %p117 = scmp.ne.s32.totalorder %s109, %s112
      %p118 = scmp.eq.s32.totalorder %s17, 0
      %p119 = por %p117, %p118
      %p120 = scmp.ne.s32.totalorder %s109, %s112
      %p121 = scmp.eq.s32.totalorder %s22, 1
      %p122 = por %p120, %p121
      %p123 = scmp.ne.s32.totalorder %s112, %s113
      %p124 = scmp.eq.s32.totalorder %s22, 0
      %p125 = por %p123, %p124
      %p126 = scmp.ne.s32.totalorder %s112, %s113
      %p127 = scmp.eq.s32.totalorder %s23, 1
      %p128 = por %p126, %p127
      %p130 = scmp.ne.s32.totalorder %s113, %s129
      %p131 = scmp.eq.s32.totalorder %s23, 0
      %p132 = por %p130, %p131
      %p133 = scmp.le.s32.totalorder 1, %s17
      %p134 = scmp.lt.s32.totalorder %s17, 3
      %p135 = pnand %p133, %p134
      %p136 = pneg %p135
      // Predicated region
      $region9: #{tpu_custom_call.1} parent=5 // pred_check
        _
      $region10: #{tpu_custom_call.1} parent=5 // pred_check_branch
        %138 = sbr.rel (%p135) target = $region12
      $region11: #{tpu_custom_call.1} parent=5 // pred_region
        %s139 = ssub.s32 %s17, 1
        // Predicated region
        $region13: #{tpu_custom_call.1} parent=11 // pred_check
          %p140 = pneg %p50
        $region14: #{tpu_custom_call.1} parent=11 // pred_check_branch
          %142 = sbr.rel (%p140) target = $region16
        $region15: #{tpu_custom_call.1} parent=11 // pred_region
          %144 = vsyncadd [#allocation5], 0
          %s146 = sshll.u32 %s0, 4
          %s147 = int_to_ptr.hbm [resolvable:$true] %s146
          %s148 = sshll.u32 [#allocation4], 4
          %s149 = int_to_ptr.vmem [resolvable:$true] %s148
          %151 = dma.hbm_to_vmem [thread:$0]  %s147, 128, %s149, [#allocation5]
        $region16: #{tpu_custom_call.1} parent=11 // pred_fallthru
          _
        // Predicated region
        $region17: #{tpu_custom_call.1} parent=11 // pred_check
          %p152 = pneg %p71
        $region18: #{tpu_custom_call.1} parent=11 // pred_check_branch
          %154 = sbr.rel (%p152) target = $region20
        $region19: #{tpu_custom_call.1} parent=11 // pred_region
          %156 = vsyncadd [#allocation7], 0
          %s158 = sshll.u32 %s1, 4
          %s159 = int_to_ptr.hbm [resolvable:$true] %s158
          %161 = dma.hbm_to_smem %s159, 16, [#allocation8], [#allocation7]
        $region20: #{tpu_custom_call.1} parent=11 // pred_fallthru
          _
      $region12: #{tpu_custom_call.1} parent=5 // pred_fallthru
        _
      %p162 = scmp.lt.s32.totalorder %s17, 2
      // Predicated region
      $region21: #{tpu_custom_call.1} parent=5 // pred_check
        %p163 = pneg %p162
      $region22: #{tpu_custom_call.1} parent=5 // pred_check_branch
        %165 = sbr.rel (%p163) target = $region24
      $region23: #{tpu_custom_call.1} parent=5 // pred_region
        // Predicated region
        $region25: #{tpu_custom_call.1} parent=23 // pred_check
          %p166 = pneg %p93
        $region26: #{tpu_custom_call.1} parent=23 // pred_check_branch
          %168 = sbr.rel (%p166) target = $region28
        $region27: #{tpu_custom_call.1} parent=23 // pred_region
          %s169 = sand.u32 %s83, 1
          %s170 = scalar_lea.sflag [#allocation10], %s169
          %s171 = sand.u32 %s83, 1
          %s172 = smul.addr %s171, 8
          %s173 = scalar_lea.vmem [#allocation9], %s172
          %175 = vsyncadd %s170, 0
          %s176 = smul.addr %s25, 2
          %s177 = smul.addr %s24, 2
          %s178 = sadd.s32 %s176, %s177
          %s179 = smul.addr %s178, 4
          %s180 = scalar_lea.hbm %s2, %s179
          %s182 = sshll.u32 %s180, 4
          %s183 = int_to_ptr.hbm [resolvable:$true] %s182
          %s184 = sshll.u32 %s173, 4
          %s185 = int_to_ptr.vmem [resolvable:$true] %s184
          %187 = dma.hbm_to_vmem [thread:$0]  %s183, 128, %s185, %s170
        $region28: #{tpu_custom_call.1} parent=23 // pred_fallthru
          _
      $region24: #{tpu_custom_call.1} parent=5 // pred_fallthru
        _
      %p188 = scmp.le.s32.totalorder 1, %s17
      %p189 = scmp.lt.s32.totalorder %s17, 3
      %p190 = pnand %p188, %p189
      %p191 = pneg %p190
      // Predicated region
      $region29: #{tpu_custom_call.1} parent=5 // pred_check
        _
      $region30: #{tpu_custom_call.1} parent=5 // pred_check_branch
        %193 = sbr.rel (%p190) target = $region32
      $region31: #{tpu_custom_call.1} parent=5 // pred_region
        %s194 = ssub.s32 %s17, 1
        // Predicated region
        $region33: #{tpu_custom_call.1} parent=31 // pred_check
          %p195 = pneg %p50
        $region34: #{tpu_custom_call.1} parent=31 // pred_check_branch
          %197 = sbr.rel (%p195) target = $region36
        $region35: #{tpu_custom_call.1} parent=31 // pred_region
          %199 = dma.done [#allocation5], 128
        $region36: #{tpu_custom_call.1} parent=31 // pred_fallthru
          _
        // Predicated region
        $region37: #{tpu_custom_call.1} parent=31 // pred_check
          %p200 = pneg %p71
        $region38: #{tpu_custom_call.1} parent=31 // pred_check_branch
          %202 = sbr.rel (%p200) target = $region40
        $region39: #{tpu_custom_call.1} parent=31 // pred_region
          %204 = dma.done [#allocation7], 16
        $region40: #{tpu_custom_call.1} parent=31 // pred_fallthru
          _
        %s205 = sand.u32 %s86, 1
        %s206 = scalar_lea.sflag [#allocation10], %s205
        %s207 = sand.u32 %s86, 1
        %s208 = smul.addr %s207, 8
        %s209 = scalar_lea.vmem [#allocation9], %s208
        // Predicated region
        $region41: #{tpu_custom_call.1} parent=31 // pred_check
          %p210 = pneg %p99
        $region42: #{tpu_custom_call.1} parent=31 // pred_check_branch
          %212 = sbr.rel (%p210) target = $region44
        $region43: #{tpu_custom_call.1} parent=31 // pred_region
          %214 = dma.done %s206, 128
        $region44: #{tpu_custom_call.1} parent=31 // pred_fallthru
          _
        %215 = sfence
        %p216 = pneg %p50
        %p217 = pneg %p47
        %p218 = pneg %p71
        %p219 = pneg %p68
        %s220 = sand.u32 %s86, 1
        %s221 = scalar_lea.sflag [#allocation10], %s220
        %s222 = sand.u32 %s86, 1
        %s223 = smul.addr %s222, 8
        %s224 = scalar_lea.vmem [#allocation9], %s223
        %p225 = pneg %p99
        %p226 = pneg %p96
        %p227 = pneg %p125
        %p228 = pneg %p122
        %s229 = sand.u32 %s112, 1
        %s230 = scalar_lea.sflag [#allocation6], %s229
        %s231 = sand.u32 %s112, 1
        %s232 = smul.addr %s231, 2
        %s233 = scalar_lea.vmem [#allocation11], %s232
        %v234 = vld [vmem:[%s209] sm:$0xff]
        %236 = vst [vmem:[#allocation1] ss:$2 sm:$0xff] %v234
        %v237 = vld.sshfl [vmem:[#allocation1] sm:$0xff pattern:$0x75316420]
        %v238 = vld.sshfl [vmem:[#allocation1 + $0x8] sm:$0xff pattern:$0x75316420]
        %vm241 = vcmask 1043456
        %v242 = vsel %vm241, %v237, -inf
        %v243 = vrot.slane %v242, 4
        %v244 = vmax.f32 %v242, %v243
        %v245 = vrot.slane %v244, 2
        %v246 = vmax.f32 %v244, %v245
        %v247 = vrot.slane %v246, 1
        %v248 = vmax.f32 %v246, %v247
        %v249 = vsel %vm241, %v238, -inf
        %v250 = vrot.slane %v249, 4
        %v251 = vmax.f32 %v249, %v250
        %v252 = vrot.slane %v251, 2
        %v253 = vmax.f32 %v251, %v252
        %v254 = vrot.slane %v253, 1
        %v255 = vmax.f32 %v253, %v254
        %256 = vst [vmem:[#allocation1] ss:$2 sm:$0xff] %v234
        %v257 = vld.sshfl [vmem:[#allocation1] sm:$0xff pattern:$0x75316420]
        %v258 = vld.sshfl [vmem:[#allocation1 + $0x8] sm:$0xff pattern:$0x75316420]
        %v261 = vsel %vm241, %v257, 0.0
        %v262 = vrot.slane %v261, 4
        %v263 = vadd.f32 %v261, %v262
        %v264 = vrot.slane %v263, 2
        %v265 = vadd.f32 %v263, %v264
        %v266 = vrot.slane %v265, 1
        %v267 = vadd.f32 %v265, %v266
        %v268 = vsel %vm241, %v258, 0.0
        %v269 = vrot.slane %v268, 4
        %v270 = vadd.f32 %v268, %v269
        %v271 = vrot.slane %v270, 2
        %v272 = vadd.f32 %v270, %v271
        %v273 = vrot.slane %v272, 1
        %v274 = vadd.f32 %v272, %v273
        %p275 = scmp.eq.s32.totalorder %s27, 0
        // Predicated region
        $region45: #{tpu_custom_call.1} parent=31 // pred_check
          %p276 = pneg %p275
        $region46: #{tpu_custom_call.1} parent=31 // pred_check_branch
          %278 = sbr.rel (%p276) target = $region48
        $region47: #{tpu_custom_call.1} parent=31 // pred_region
          %v279 = vlaneseq
          %vm280 = vcmp.ge.s32.totalorder %v279, 0
          %vm281 = vcmp.lt.s32.totalorder %v279, 256
          %vm282 = vmand %vm280, %vm281
          %283 = vst.msk [vmem:[#allocation2] sm:$0x3] %vm282, -inf
          %284 = vst.msk [vmem:[#allocation3] sm:$0x3] %vm282, 0.0
        $region48: #{tpu_custom_call.1} parent=31 // pred_fallthru
          _
        %v285 = vld [vmem:[#allocation2] sm:$0x3]
        %v288 = vrot.slane %v255, 7
        %vm289 = vcmask 1040384
        %v290 = vsel %vm289, %v248, %v288
        %v292 = vmax.f32 %v285, %v290
        %v293 = vlaneseq
        %vm294 = vcmp.ge.s32.totalorder %v293, 0
        %vm295 = vcmp.lt.s32.totalorder %v293, 256
        %vm296 = vmand %vm294, %vm295
        %297 = vst.msk [vmem:[#allocation2] sm:$0x3] %vm296, %v292
        %v298 = vld [vmem:[#allocation3] sm:$0x3]
        %v301 = vrot.slane %v274, 7
        %v302 = vsel %vm289, %v267, %v301
        %v304 = vadd.f32 %v298, %v302
        %305 = vst.msk [vmem:[#allocation3] sm:$0x3] %vm296, %v304
        // Predicated region
        $region49: #{tpu_custom_call.1} parent=31 // pred_check
          %p306 = pneg %p275
        $region50: #{tpu_custom_call.1} parent=31 // pred_check_branch
          %308 = sbr.rel (%p306) target = $region52
        $region51: #{tpu_custom_call.1} parent=31 // pred_region
          %v309 = vld [vmem:[#allocation2] sm:$0x3]
          %v310 = vld [vmem:[#allocation3] sm:$0x3]
          %v311 = vmul.f32 %v310, 0.25
          %v313 = vperm.slane %v309, 0
          %v314 = vperm.slane %v309, 1
          %v318 = vperm.slane %v311, 0
          %v319 = vperm.slane %v311, 1
          %v322 = vsel %vm289, %v313, %v318
          %v323 = vsel %vm289, %v314, %v319
          %v324 = vld [vmem:[#allocation4] sm:$0xff]
          %v325 = vlaneseq
          %v326 = vand.u32 %v325, 127
          %v327 = vadd.s32 %v326, 128
          %vm328 = vcmp.lt.s32.totalorder %v326, 0
          %v329 = vsub.s32 0, %v326
          %v330 = vsel %vm328, %v329, %v326
          %v331 = vshrl.u32 %v330, 4
          %v332 = vand.u32 %v330, 15
          %v333 = vsub.s32 0, %v332
          %v334 = vsel %vm328, %v333, %v332
          %vm335 = vcmp.lt.s32.totalorder %v327, 0
          %v336 = vsub.s32 0, %v327
          %v337 = vsel %vm335, %v336, %v327
          %v338 = vshrl.u32 %v337, 4
          %v339 = vand.u32 %v337, 15
          %v340 = vsub.s32 0, %v339
          %v341 = vsel %vm335, %v340, %v339
          %342 = vrot.lane.b32.xlu0 %v322, 48
          %v343 = vpop.permute.xlu0 %342
          %344 = vrot.lane.b32.xlu0 %v323, 48
          %v345 = vpop.permute.xlu0 %344
          %vm346 = vcmp.lt.s32.totalorder %v326, 48
          %v347 = vsel %vm346, %v343, %v345
          %v348 = vsel %vm346, %v345, %v343
          %vm349 = vcmp.ge.s32.totalorder %v326, 48
          %vm350 = vcmp.ge.s32.totalorder %v327, 48
          %vm351 = vcmp.lt.s32.totalorder %v326, 304
          %vm352 = vcmp.lt.s32.totalorder %v327, 304
          %vm353 = vmand %vm349, %vm351
          %vm354 = vmand %vm350, %vm352
          %v355 = vsel %vm353, 1, 0
          %v356 = vsel %vm354, 1, 0
          %vm357 = vcmp.eq.s32.totalorder %v355, 1
          %vm358 = vcmp.eq.s32.totalorder %v356, 1
          %v359 = vsel %vm357, %v348, 0.0
          %v360 = vsel %vm358, %v347, 0.0
          %362 = vset.pattern.permute.xlu0 0
          %363 = vperm.xlu0 %362, %v324
          %v364 = vpop.permute.xlu0 %363
          %v366 = vperm.slane %v359, 0
          %v367 = vperm.slane %v360, 0
          %v368 = vmul.f32 %v364, %v366
          %v369 = vmul.f32 %v364, %v367
          %v370 = vadd.f32 %v368, 0.0
          %v371 = vadd.f32 %v369, 0.0
          %372 = vset.pattern.permute.xlu0 7
          %373 = vperm.xlu0 %372, %v324
          %v374 = vpop.permute.xlu0 %373
          %v376 = vperm.slane %v359, 1
          %v377 = vperm.slane %v360, 1
          %v378 = vmul.f32 %v374, %v376
          %v379 = vmul.f32 %v374, %v377
          %v380 = vadd.f32 %v370, %v378
          %v381 = vadd.f32 %v371, %v379
          %382 = vrot.lane.b32.xlu0 %v322, 32
          %v383 = vpop.permute.xlu0 %382
          %384 = vrot.lane.b32.xlu0 %v323, 32
          %v385 = vpop.permute.xlu0 %384
          %vm386 = vcmp.lt.s32.totalorder %v326, 32
          %v387 = vsel %vm386, %v383, %v385
          %v388 = vsel %vm386, %v385, %v383
          %vm389 = vcmp.ge.s32.totalorder %v326, 32
          %vm390 = vcmp.ge.s32.totalorder %v327, 32
          %vm391 = vcmp.lt.s32.totalorder %v326, 288
          %vm392 = vcmp.lt.s32.totalorder %v327, 288
          %vm393 = vmand %vm389, %vm391
          %vm394 = vmand %vm390, %vm392
          %v395 = vsel %vm393, 1, 0
          %v396 = vsel %vm394, 1, 0
          %vm397 = vcmp.eq.s32.totalorder %v395, 1
          %vm398 = vcmp.eq.s32.totalorder %v396, 1
          %v399 = vsel %vm397, %v388, 0.0
          %v400 = vsel %vm398, %v387, 0.0
          %401 = vset.pattern.permute.xlu0 1
          %402 = vperm.xlu0 %401, %v324
          %v403 = vpop.permute.xlu0 %402
          %v405 = vperm.slane %v399, 0
          %v406 = vperm.slane %v400, 0
          %v407 = vmul.f32 %v403, %v405
          %v408 = vmul.f32 %v403, %v406
          %v409 = vadd.f32 %v380, %v407
          %v410 = vadd.f32 %v381, %v408
          %411 = vset.pattern.permute.xlu0 8
          %412 = vperm.xlu0 %411, %v324
          %v413 = vpop.permute.xlu0 %412
          %v415 = vperm.slane %v399, 1
          %v416 = vperm.slane %v400, 1
          %v417 = vmul.f32 %v413, %v415
          %v418 = vmul.f32 %v413, %v416
          %v419 = vadd.f32 %v409, %v417
          %v420 = vadd.f32 %v410, %v418
          %421 = vrot.lane.b32.xlu0 %v322, 16
          %v422 = vpop.permute.xlu0 %421
          %423 = vrot.lane.b32.xlu0 %v323, 16
          %v424 = vpop.permute.xlu0 %423
          %vm425 = vcmp.lt.s32.totalorder %v326, 16
          %v426 = vsel %vm425, %v422, %v424
          %v427 = vsel %vm425, %v424, %v422
          %vm428 = vcmp.ge.s32.totalorder %v326, 16
          %vm429 = vcmp.ge.s32.totalorder %v327, 16
          %vm430 = vcmp.lt.s32.totalorder %v326, 272
          %vm431 = vcmp.lt.s32.totalorder %v327, 272
          %vm432 = vmand %vm428, %vm430
          %vm433 = vmand %vm429, %vm431
          %v434 = vsel %vm432, 1, 0
          %v435 = vsel %vm433, 1, 0
          %vm436 = vcmp.eq.s32.totalorder %v434, 1
          %vm437 = vcmp.eq.s32.totalorder %v435, 1
          %v438 = vsel %vm436, %v427, 0.0
          %v439 = vsel %vm437, %v426, 0.0
          %440 = vset.pattern.permute.xlu0 2
          %441 = vperm.xlu0 %440, %v324
          %v442 = vpop.permute.xlu0 %441
          %v444 = vperm.slane %v438, 0
          %v445 = vperm.slane %v439, 0
          %v446 = vmul.f32 %v442, %v444
          %v447 = vmul.f32 %v442, %v445
          %v448 = vadd.f32 %v419, %v446
          %v449 = vadd.f32 %v420, %v447
          %450 = vset.pattern.permute.xlu0 9
          %451 = vperm.xlu0 %450, %v324
          %v452 = vpop.permute.xlu0 %451
          %v454 = vperm.slane %v438, 1
          %v455 = vperm.slane %v439, 1
          %v456 = vmul.f32 %v452, %v454
          %v457 = vmul.f32 %v452, %v455
          %v458 = vadd.f32 %v448, %v456
          %v459 = vadd.f32 %v449, %v457
          %460 = vset.pattern.permute.xlu0 3
          %461 = vperm.xlu0 %460, %v324
          %v462 = vpop.permute.xlu0 %461
          %v464 = vperm.slane %v322, 0
          %v465 = vperm.slane %v323, 0
          %v466 = vmul.f32 %v462, %v464
          %v467 = vmul.f32 %v462, %v465
          %v468 = vadd.f32 %v458, %v466
          %v469 = vadd.f32 %v459, %v467
          %470 = vset.pattern.permute.xlu0 10
          %471 = vperm.xlu0 %470, %v324
          %v472 = vpop.permute.xlu0 %471
          %v474 = vperm.slane %v322, 1
          %v475 = vperm.slane %v323, 1
          %v476 = vmul.f32 %v472, %v474
          %v477 = vmul.f32 %v472, %v475
          %v478 = vadd.f32 %v468, %v476
          %v479 = vadd.f32 %v469, %v477
          %480 = vrot.lane.b32.xlu0 %v322, 112
          %v481 = vpop.permute.xlu0 %480
          %482 = vrot.lane.b32.xlu0 %v323, 112
          %v483 = vpop.permute.xlu0 %482
          %vm484 = vcmp.lt.s32.totalorder %v326, 112
          %v485 = vsel %vm484, %v481, %v483
          %v486 = vsel %vm484, %v483, %v481
          %vm487 = vcmp.ge.s32.totalorder %v326, 4294967280
          %vm488 = vcmp.ge.s32.totalorder %v327, 4294967280
          %vm489 = vcmp.lt.s32.totalorder %v326, 240
          %vm490 = vcmp.lt.s32.totalorder %v327, 240
          %vm491 = vmand %vm487, %vm489
          %vm492 = vmand %vm488, %vm490
          %v493 = vsel %vm491, 1, 0
          %v494 = vsel %vm492, 1, 0
          %vm495 = vcmp.eq.s32.totalorder %v493, 1
          %vm496 = vcmp.eq.s32.totalorder %v494, 1
          %v497 = vsel %vm495, %v485, 0.0
          %v498 = vsel %vm496, %v486, 0.0
          %499 = vset.pattern.permute.xlu0 4
          %500 = vperm.xlu0 %499, %v324
          %v501 = vpop.permute.xlu0 %500
          %v503 = vperm.slane %v497, 0
          %v504 = vperm.slane %v498, 0
          %v505 = vmul.f32 %v501, %v503
          %v506 = vmul.f32 %v501, %v504
          %v507 = vadd.f32 %v478, %v505
          %v508 = vadd.f32 %v479, %v506
          %509 = vset.pattern.permute.xlu0 11
          %510 = vperm.xlu0 %509, %v324
          %v511 = vpop.permute.xlu0 %510
          %v513 = vperm.slane %v497, 1
          %v514 = vperm.slane %v498, 1
          %v515 = vmul.f32 %v511, %v513
          %v516 = vmul.f32 %v511, %v514
          %v517 = vadd.f32 %v507, %v515
          %v518 = vadd.f32 %v508, %v516
          %519 = vrot.lane.b32.xlu0 %v322, 96
          %v520 = vpop.permute.xlu0 %519
          %521 = vrot.lane.b32.xlu0 %v323, 96
          %v522 = vpop.permute.xlu0 %521
          %vm523 = vcmp.lt.s32.totalorder %v326, 96
          %v524 = vsel %vm523, %v520, %v522
          %v525 = vsel %vm523, %v522, %v520
          %vm526 = vcmp.ge.s32.totalorder %v326, 4294967264
          %vm527 = vcmp.ge.s32.totalorder %v327, 4294967264
          %vm528 = vcmp.lt.s32.totalorder %v326, 224
          %vm529 = vcmp.lt.s32.totalorder %v327, 224
          %vm530 = vmand %vm526, %vm528
          %vm531 = vmand %vm527, %vm529
          %v532 = vsel %vm530, 1, 0
          %v533 = vsel %vm531, 1, 0
          %vm534 = vcmp.eq.s32.totalorder %v532, 1
          %vm535 = vcmp.eq.s32.totalorder %v533, 1
          %v536 = vsel %vm534, %v524, 0.0
          %v537 = vsel %vm535, %v525, 0.0
          %538 = vset.pattern.permute.xlu0 5
          %539 = vperm.xlu0 %538, %v324
          %v540 = vpop.permute.xlu0 %539
          %v542 = vperm.slane %v536, 0
          %v543 = vperm.slane %v537, 0
          %v544 = vmul.f32 %v540, %v542
          %v545 = vmul.f32 %v540, %v543
          %v546 = vadd.f32 %v517, %v544
          %v547 = vadd.f32 %v518, %v545
          %548 = vset.pattern.permute.xlu0 12
          %549 = vperm.xlu0 %548, %v324
          %v550 = vpop.permute.xlu0 %549
          %v552 = vperm.slane %v536, 1
          %v553 = vperm.slane %v537, 1
          %v554 = vmul.f32 %v550, %v552
          %v555 = vmul.f32 %v550, %v553
          %v556 = vadd.f32 %v546, %v554
          %v557 = vadd.f32 %v547, %v555
          %558 = vrot.lane.b32.xlu0 %v322, 80
          %v559 = vpop.permute.xlu0 %558
          %560 = vrot.lane.b32.xlu0 %v323, 80
          %v561 = vpop.permute.xlu0 %560
          %vm562 = vcmp.lt.s32.totalorder %v326, 80
          %v563 = vsel %vm562, %v559, %v561
          %v564 = vsel %vm562, %v561, %v559
          %vm565 = vcmp.ge.s32.totalorder %v326, 4294967248
          %vm566 = vcmp.ge.s32.totalorder %v327, 4294967248
          %vm567 = vcmp.lt.s32.totalorder %v326, 208
          %vm568 = vcmp.lt.s32.totalorder %v327, 208
          %vm569 = vmand %vm565, %vm567
          %vm570 = vmand %vm566, %vm568
          %v571 = vsel %vm569, 1, 0
          %v572 = vsel %vm570, 1, 0
          %vm573 = vcmp.eq.s32.totalorder %v571, 1
          %vm574 = vcmp.eq.s32.totalorder %v572, 1
          %v575 = vsel %vm573, %v563, 0.0
          %v576 = vsel %vm574, %v564, 0.0
          %577 = vset.pattern.permute.xlu0 6
          %578 = vperm.xlu0 %577, %v324
          %v579 = vpop.permute.xlu0 %578
          %v581 = vperm.slane %v575, 0
          %v582 = vperm.slane %v576, 0
          %v583 = vmul.f32 %v579, %v581
          %v584 = vmul.f32 %v579, %v582
          %v585 = vadd.f32 %v556, %v583
          %v586 = vadd.f32 %v557, %v584
          %587 = vset.pattern.permute.xlu0 13
          %588 = vperm.xlu0 %587, %v324
          %v589 = vpop.permute.xlu0 %588
          %v591 = vperm.slane %v575, 1
          %v592 = vperm.slane %v576, 1
          %v593 = vmul.f32 %v589, %v591
          %v594 = vmul.f32 %v589, %v592
          %v595 = vadd.f32 %v585, %v593
          %v596 = vadd.f32 %v586, %v594
          %597 = vrot.lane.b32.xlu0 %v595, 3
          %v598 = vpop.permute.xlu0 %597
          %599 = vrot.lane.b32.xlu0 %v596, 3
          %v600 = vpop.permute.xlu0 %599
          %vm601 = vcmp.lt.s32.totalorder %v326, 3
          %v602 = vsel %vm601, %v598, %v600
          %v603 = vsel %vm601, %v600, %v598
          %v604 = vadd.s32 %v334, 4294967293
          %v605 = vadd.s32 %v341, 4294967293
          %vm606 = vcmp.ge.s32.totalorder %v604, 0
          %vm607 = vcmp.ge.s32.totalorder %v605, 0
          %vm608 = vcmp.lt.s32.totalorder %v604, 16
          %vm609 = vcmp.lt.s32.totalorder %v605, 16
          %vm610 = vmand %vm606, %vm608
          %vm611 = vmand %vm607, %vm609
          %v612 = vsel %vm610, %v603, 0.0
          %v613 = vsel %vm611, %v602, 0.0
          %v614 = vadd.f32 %v612, 0.0
          %v615 = vadd.f32 %v613, 0.0
          %v618 = vrot.slane %v595, 1
          %v619 = vrot.slane %v596, 1
          %622 = vrot.lane.b32.xlu0 %v618, 2
          %v623 = vpop.permute.xlu0 %622
          %624 = vrot.lane.b32.xlu0 %v619, 2
          %v625 = vpop.permute.xlu0 %624
          %vm626 = vcmp.lt.s32.totalorder %v326, 2
          %v627 = vsel %vm626, %v623, %v625
          %v628 = vsel %vm626, %v625, %v623
          %v629 = vadd.s32 %v334, 4294967294
          %v630 = vadd.s32 %v341, 4294967294
          %vm631 = vcmp.ge.s32.totalorder %v629, 0
          %vm632 = vcmp.ge.s32.totalorder %v630, 0
          %vm633 = vcmp.lt.s32.totalorder %v629, 16
          %vm634 = vcmp.lt.s32.totalorder %v630, 16
          %vm635 = vmand %vm631, %vm633
          %vm636 = vmand %vm632, %vm634
          %v637 = vsel %vm635, %v628, 0.0
          %v638 = vsel %vm636, %v627, 0.0
          %v639 = vadd.f32 %v614, %v637
          %v640 = vadd.f32 %v615, %v638
          %v641 = vrot.slane %v595, 2
          %v642 = vrot.slane %v596, 2
          %645 = vrot.lane.b32.xlu0 %v641, 1
          %v646 = vpop.permute.xlu0 %645
          %647 = vrot.lane.b32.xlu0 %v642, 1
          %v648 = vpop.permute.xlu0 %647
          %vm649 = vcmp.lt.s32.totalorder %v326, 1
          %v650 = vsel %vm649, %v646, %v648
          %v651 = vsel %vm649, %v648, %v646
          %v652 = vadd.s32 %v334, 4294967295
          %v653 = vadd.s32 %v341, 4294967295
          %vm654 = vcmp.ge.s32.totalorder %v652, 0
          %vm655 = vcmp.ge.s32.totalorder %v653, 0
          %vm656 = vcmp.lt.s32.totalorder %v652, 16
          %vm657 = vcmp.lt.s32.totalorder %v653, 16
          %vm658 = vmand %vm654, %vm656
          %vm659 = vmand %vm655, %vm657
          %v660 = vsel %vm658, %v651, 0.0
          %v661 = vsel %vm659, %v650, 0.0
          %v662 = vadd.f32 %v639, %v660
          %v663 = vadd.f32 %v640, %v661
          %v664 = vrot.slane %v595, 3
          %v665 = vrot.slane %v596, 3
          %v668 = vadd.f32 %v662, %v664
          %v669 = vadd.f32 %v663, %v665
          %v670 = vrot.slane %v595, 4
          %v671 = vrot.slane %v596, 4
          %674 = vrot.lane.b32.xlu0 %v670, 127
          %v675 = vpop.permute.xlu0 %674
          %676 = vrot.lane.b32.xlu0 %v671, 127
          %v677 = vpop.permute.xlu0 %676
          %vm678 = vcmp.lt.s32.totalorder %v326, 127
          %v679 = vsel %vm678, %v675, %v677
          %v680 = vsel %vm678, %v677, %v675
          %v681 = vadd.s32 %v334, 1
          %v682 = vadd.s32 %v341, 1
          %vm683 = vcmp.ge.s32.totalorder %v681, 0
          %vm684 = vcmp.ge.s32.totalorder %v682, 0
          %vm685 = vcmp.lt.s32.totalorder %v681, 16
          %vm686 = vcmp.lt.s32.totalorder %v682, 16
          %vm687 = vmand %vm683, %vm685
          %vm688 = vmand %vm684, %vm686
          %v689 = vsel %vm687, %v679, 0.0
          %v690 = vsel %vm688, %v680, 0.0
          %v691 = vadd.f32 %v668, %v689
          %v692 = vadd.f32 %v669, %v690
          %v693 = vrot.slane %v595, 5
          %v694 = vrot.slane %v596, 5
          %697 = vrot.lane.b32.xlu0 %v693, 126
          %v698 = vpop.permute.xlu0 %697
          %699 = vrot.lane.b32.xlu0 %v694, 126
          %v700 = vpop.permute.xlu0 %699
          %vm701 = vcmp.lt.s32.totalorder %v326, 126
          %v702 = vsel %vm701, %v698, %v700
          %v703 = vsel %vm701, %v700, %v698
          %v704 = vadd.s32 %v334, 2
          %v705 = vadd.s32 %v341, 2
          %vm706 = vcmp.ge.s32.totalorder %v704, 0
          %vm707 = vcmp.ge.s32.totalorder %v705, 0
          %vm708 = vcmp.lt.s32.totalorder %v704, 16
          %vm709 = vcmp.lt.s32.totalorder %v705, 16
          %vm710 = vmand %vm706, %vm708
          %vm711 = vmand %vm707, %vm709
          %v712 = vsel %vm710, %v702, 0.0
          %v713 = vsel %vm711, %v703, 0.0
          %v714 = vadd.f32 %v691, %v712
          %v715 = vadd.f32 %v692, %v713
          %v716 = vrot.slane %v595, 6
          %v717 = vrot.slane %v596, 6
          %720 = vrot.lane.b32.xlu0 %v716, 125
          %v721 = vpop.permute.xlu0 %720
          %722 = vrot.lane.b32.xlu0 %v717, 125
          %v723 = vpop.permute.xlu0 %722
          %vm724 = vcmp.lt.s32.totalorder %v326, 125
          %v725 = vsel %vm724, %v721, %v723
          %v726 = vsel %vm724, %v723, %v721
          %v727 = vadd.s32 %v334, 3
          %v728 = vadd.s32 %v341, 3
          %vm729 = vcmp.ge.s32.totalorder %v727, 0
          %vm730 = vcmp.ge.s32.totalorder %v728, 0
          %vm731 = vcmp.lt.s32.totalorder %v727, 16
          %vm732 = vcmp.lt.s32.totalorder %v728, 16
          %vm733 = vmand %vm729, %vm731
          %vm734 = vmand %vm730, %vm732
          %v735 = vsel %vm733, %v725, 0.0
          %v736 = vsel %vm734, %v726, 0.0
          %v737 = vadd.f32 %v714, %v735
          %v738 = vadd.f32 %v715, %v736
          %s739 = sld [smem:[#allocation8]]
          %v740 = vstv %s739
          %v741 = vadd.f32 %v737, %v740
          %v742 = vadd.f32 %v738, %v740
          %s743 = sld [smem:[#allocation8 + $0x1]]
          %v744 = vstv %s743
          %v745 = vmul.f32 %v744, %v741
          %v746 = vmul.f32 %v744, %v742
          %s747 = sld [smem:[#allocation8 + $0x2]]
          %v748 = vstv %s747
          %v749 = vadd.f32 %v745, %v748
          %v750 = vadd.f32 %v746, %v748
          %v751 = vxor.u32 %v749, 2147483648
          %v752 = vxor.u32 %v750, 2147483648
          %v753 = vmul.f32 %v751, 1.442695
          %v754 = vpow.pop %v753
          %v755 = vmul.f32 %v752, 1.442695
          %v756 = vpow.pop %v755
          %v757 = vadd.f32 %v754, 1.0
          %v758 = vadd.f32 %v756, 1.0
          %v759 = vrcp.pop %v757
          %v760 = vmul.f32 %v757, %v759
          %v761 = vsub.f32 1.0, %v760
          %v762 = vmul.f32 %v759, %v761
          %v763 = vadd.f32 %v759, %v762
          %vm764 = vweird.f32 %v757
          %vm765 = vweird.f32 %v759
          %vm766 = vmor %vm764, %vm765
          %v767 = vsel %vm766, %v759, %v763
          %v768 = vand.u32 2147483647, %v757
          %vm769 = vcmp.eq.f32.partialorder %v768, 8.507059e+37
          %v770 = vand.u32 %v757, 2147483648
          %v771 = vor.u32 1.1754944e-38, %v770
          %v772 = vsel %vm769, %v771, %v767
          %v773 = vmul.f32 1.0, %v772
          %v774 = vrcp.pop %v758
          %v775 = vmul.f32 %v758, %v774
          %v776 = vsub.f32 1.0, %v775
          %v777 = vmul.f32 %v774, %v776
          %v778 = vadd.f32 %v774, %v777
          %vm779 = vweird.f32 %v758
          %vm780 = vweird.f32 %v774
          %vm781 = vmor %vm779, %vm780
          %v782 = vsel %vm781, %v774, %v778
          %v783 = vand.u32 2147483647, %v758
          %vm784 = vcmp.eq.f32.partialorder %v783, 8.507059e+37
          %v785 = vand.u32 %v758, 2147483648
          %v786 = vor.u32 1.1754944e-38, %v785
          %v787 = vsel %vm784, %v786, %v782
          %v788 = vmul.f32 1.0, %v787
          %v791 = vrot.slane %v788, 7
          %v792 = vsel %vm289, %v773, %v791
          %794 = vst.msk [vmem:[%s233] sm:$0x3] %vm296, %v792
        $region52: #{tpu_custom_call.1} parent=31 // pred_fallthru
          _
        %s795 = sand.u32 %s112, 1
        %s796 = scalar_lea.sflag [#allocation6], %s795
        %s797 = sand.u32 %s112, 1
        %s798 = smul.addr %s797, 2
        %s799 = scalar_lea.vmem [#allocation11], %s798
        // Predicated region
        $region53: #{tpu_custom_call.1} parent=31 // pred_check
          %p800 = pneg %p122
        $region54: #{tpu_custom_call.1} parent=31 // pred_check_branch
          %802 = sbr.rel (%p800) target = $region56
        $region55: #{tpu_custom_call.1} parent=31 // pred_region
          %804 = vsyncadd %s796, 0
          %s805 = smul.addr %s26, 2
          %s806 = scalar_lea.hbm %s3, %s805
          %s808 = sshll.u32 %s799, 4
          %s809 = int_to_ptr.vmem [resolvable:$true] %s808
          %s810 = sshll.u32 %s806, 4
          %s811 = int_to_ptr.hbm [resolvable:$true] %s810
          %813 = dma.vmem_to_hbm [thread:$0]  %s809, 32, %s811, %s796
        $region56: #{tpu_custom_call.1} parent=31 // pred_fallthru
          _
      $region32: #{tpu_custom_call.1} parent=5 // pred_fallthru
        _
      %p814 = scmp.le.s32.totalorder 2, %s17
      // Predicated region
      $region57: #{tpu_custom_call.1} parent=5 // pred_check
        %p815 = pneg %p814
      $region58: #{tpu_custom_call.1} parent=5 // pred_check_branch
        %817 = sbr.rel (%p815) target = $region60
      $region59: #{tpu_custom_call.1} parent=5 // pred_region
        %s818 = ssub.s32 %s17, 2
        // Predicated region
        $region61: #{tpu_custom_call.1} parent=59 // pred_check
          %p819 = pneg %p128
        $region62: #{tpu_custom_call.1} parent=59 // pred_check_branch
          %821 = sbr.rel (%p819) target = $region64
        $region63: #{tpu_custom_call.1} parent=59 // pred_region
          %s822 = sand.u32 %s113, 1
          %s823 = scalar_lea.sflag [#allocation6], %s822
          %s824 = sand.u32 %s113, 1
          %s825 = smul.addr %s824, 2
          %s826 = scalar_lea.vmem [#allocation11], %s825
          %828 = dma.done %s823, 32
        $region64: #{tpu_custom_call.1} parent=59 // pred_fallthru
          _
      $region60: #{tpu_custom_call.1} parent=5 // pred_fallthru
        _
    $region6: #{tpu_custom_call.1} parent=1 // loop_footer
      %s21 = sadd.s32 1, %s17
    $region7: #{tpu_custom_call.1} parent=1 // loop_footer_branch
      %16 = sbr.rel target = $region3
    $region8: #{tpu_custom_call.1} parent=1 // loop_exit
      _
    %829 = vsyncpa [#allocation5], 1
    %s830 = scalar_lea.sflag [#allocation5], 1
    %831 = vsyncpa %s830, 1
    %832 = vsyncpa [#allocation10], 1
    %s833 = scalar_lea.sflag [#allocation10], 1
    %834 = vsyncpa %s833, 1
    %835 = vsyncpa [#allocation6], 1
    %s836 = scalar_lea.sflag [#allocation6], 1
    %837 = vsyncpa %s836, 1
    %838 = vsyncpa [#allocation7], 1
    %s839 = scalar_lea.sflag [#allocation7], 1
    %840 = vsyncpa %s839, 1

</llo_original>
